<compile_context>
chip_gen: v6e
topology: v6e:2x2x1
jax: 0.10.0
libtpu: 0.0.40
codegen_flags: <defaults>
</compile_context>

<pallas_src>
import jax
import jax.numpy as jnp
from jax.experimental import pallas as pl
from jax.experimental.pallas import tpu as pltpu


def _round_up(n, m):
    return ((n + m - 1) // m) * m


def _make_kernel(x_dim, y_dim, small_k, n_sub, sub_rows):
    """Builds the per-tile kernel (static config captured via closure)."""

    def kernel(x_ref, y_ref, w1x_ref, w1y_ref, b1_ref,
               w2_ref, b2_ref, w3_ref, b3_ref, out_ref):
        # Weights / biases: VMEM-resident (constant index_map, single buffer).
        w1x, w1y, b1 = w1x_ref[...], w1y_ref[...], b1_ref[...]
        w2, b2 = w2_ref[...], b2_ref[...]
        w3, b3 = w3_ref[...], b3_ref[...]

        # Statically unrolled sub-blocks: VPU work (layer 1, ReLUs, casts) of
        # sub-block s+1 overlaps the MXU vmatmul/pop of sub-block s, and the
        # h1/h2 live ranges are bounded to sub_rows rows.
        for s in range(n_sub):
            r0 = s * sub_rows
            xs = x_ref[pl.ds(r0, sub_rows), :]
            ys = y_ref[pl.ds(r0, sub_rows), :]

            # ---- Layer 1: relu(x @ W1x + y @ W1y + b1) ----
            if small_k:
                # Degenerate K (<= 8): unrolled VPU broadcast-FMAs instead of
                # wasting the MXU; bias folded into the accumulator init.
                acc = b1 + xs[:, 0:1] * w1x[0:1, :]
                for j in range(1, x_dim):
                    acc = acc + xs[:, j:j + 1] * w1x[j:j + 1, :]
                for j in range(y_dim):
                    acc = acc + ys[:, j:j + 1] * w1y[j:j + 1, :]
                h1 = jnp.maximum(acc, 0.0)
            else:
                h1 = (jnp.dot(xs.astype(jnp.bfloat16), w1x,
                              preferred_element_type=jnp.float32)
                      + jnp.dot(ys.astype(jnp.bfloat16), w1y,
                                preferred_element_type=jnp.float32))
                h1 = jnp.maximum(h1 + b1, 0.0)

            # ---- Layer 2: relu(h1 @ W2 + b2)  (bf16 MXU, f32 accumulate) ----
            h2 = jnp.dot(h1.astype(jnp.bfloat16), w2,
                         preferred_element_type=jnp.float32)
            h2 = jnp.maximum(h2 + b2, 0.0)

            # ---- Layer 3: h2 @ W3 + b3 ----
            r = jnp.dot(h2.astype(jnp.bfloat16), w3,
                        preferred_element_type=jnp.float32) + b3
            out_ref[pl.ds(r0, sub_rows), :] = r.astype(out_ref.dtype)

    return kernel


def encoder_forward(x, y, params, *, block_b=1024):
    """x: (B, x_dim) f32, y: (B, y_dim) f32 -> (B, r_dim) f32."""
    w1x, w1y, b1, w2, b2, w3, b3 = params
    B, x_dim = x.shape
    y_dim = y.shape[1]
    h_dim = w2.shape[0]
    r_dim = w3.shape[1]

    # --- Tile / grid selection -------------------------------------------
    # >= 2 and even grid steps: keeps the auto double-buffered pipeline alive
    # for any B and lets ("parallel",) shard the batch over both v7x TCs.
    # tb is a multiple of 8 sublanes; padding is bounded (< ~9 rows/step).
    num_steps = pl.cdiv(B, block_b)
    num_steps += num_steps % 2
    num_steps = max(2, num_steps)
    tb = _round_up(pl.cdiv(B, num_steps), 8)
    B_pad = num_steps * tb
    if B_pad != B:
        pad = B_pad - B
        x = jnp.pad(x, ((0, pad), (0, 0)))
        y = jnp.pad(y, ((0, pad), (0, 0)))

    # In-kernel sub-blocking of the batch tile (MXU/VPU overlap).
    n_sub = 1
    for cand in (4, 2):
        if tb % (8 * cand) == 0 and tb // cand >= 128:
            n_sub = cand
            break
    sub_rows = tb // n_sub

    # --- dtype prep: bf16 operands for the MXU, f32 accumulation -----------
    small_k = (x_dim <= 8 and y_dim <= 8)
    if not small_k:
        w1x = w1x.astype(jnp.bfloat16)
        w1y = w1y.astype(jnp.bfloat16)
    w2 = w2.astype(jnp.bfloat16)
    w3 = w3.astype(jnp.bfloat16)
    # Biases stay f32 (added to the f32 accumulators).
    weights = (w1x, w1y, b1, w2, b2, w3, b3)

    # Weights/biases: whole-array blocks with constant index_map -> DMA'd
    # once, VMEM-resident across all grid steps; single-buffered so the
    # default second pipeline buffer doesn't waste VMEM.
    def resident(a):
        return pl.BlockSpec(a.shape, lambda i: (0,) * a.ndim,
                            pipeline_mode=pl.Buffered(buffer_count=1))

    weight_bytes = sum(int(p.size) * p.dtype.itemsize for p in weights)
    io_tile_bytes = tb * (x_dim + y_dim + r_dim) * 4       # one step, f32
    scratch_bytes = 6 * sub_rows * h_dim * 4                # h1/h2/temps
    vmem_need = weight_bytes + 2 * io_tile_bytes + scratch_bytes
    # v5e's scoped-VMEM default is 16 MiB; raise it only when actually needed
    # and stay well under v7x's 64 MiB physical VMEM.
    vmem_limit = None
    if vmem_need > (10 << 20):
        vmem_limit = int(min(2 * vmem_need + (4 << 20), 56 << 20))

    flops = 2 * B_pad * ((x_dim + y_dim) * h_dim + h_dim * h_dim + h_dim * r_dim)
    bytes_accessed = B_pad * (x_dim + y_dim + r_dim) * 4 + weight_bytes

    kernel = _make_kernel(x_dim, y_dim, small_k, n_sub, sub_rows)

    out = pl.pallas_call(
        kernel,
        out_shape=jax.ShapeDtypeStruct((B_pad, r_dim), jnp.float32),
        grid=(num_steps,),
        in_specs=[
            pl.BlockSpec((tb, x_dim), lambda i: (i, 0)),
            pl.BlockSpec((tb, y_dim), lambda i: (i, 0)),
            resident(w1x), resident(w1y), resident(b1),
            resident(w2), resident(b2),
            resident(w3), resident(b3),
        ],
        out_specs=pl.BlockSpec((tb, r_dim), lambda i: (i, 0)),
        compiler_params=pltpu.CompilerParams(
            dimension_semantics=("parallel",),
            vmem_limit_bytes=vmem_limit),
        cost_estimate=pl.CostEstimate(
            flops=flops, transcendentals=0, bytes_accessed=bytes_accessed),
    )(x, y, *weights)

    return out[:B]


def init_params(key, x_dim, y_dim, h_dim, r_dim):
    """Deterministic init mimicking PyTorch Linear (uniform +-1/sqrt(fan_in)).

    Weights are stored as (in_dim, out_dim); the layer-1 weight is split into
    the x-part and y-part so the kernel never needs the concatenated input."""
    def linear(k, fan_in, fan_out):
        kw, kb = jax.random.split(k)
        bound = 1.0 / jnp.sqrt(jnp.float32(fan_in))
        w = jax.random.uniform(kw, (fan_in, fan_out), jnp.float32, -bound, bound)
        b = jax.random.uniform(kb, (1, fan_out), jnp.float32, -bound, bound)
        return w, b

    k1, k2, k3 = jax.random.split(key, 3)
    w1, b1 = linear(k1, x_dim + y_dim, h_dim)
    w1x, w1y = w1[:x_dim], w1[x_dim:]
    w2, b2 = linear(k2, h_dim, h_dim)
    w3, b3 = linear(k3, h_dim, r_dim)
    return (w1x, w1y, b1, w2, b2, w3, b3)


if __name__ == "__main__":
    # Small shapes consistent with the module's forward signature.
    batch, x_dim, y_dim, h_dim, r_dim = 8, 2, 1, 32, 16

    key = jax.random.PRNGKey(0)
    kx, ky, kp = jax.random.split(key, 3)
    x = jax.random.normal(kx, (batch, x_dim), jnp.float32)
    y = jax.random.normal(ky, (batch, y_dim), jnp.float32)
    params = init_params(kp, x_dim, y_dim, h_dim, r_dim)

    out = encoder_forward(x, y, params)
    out = jax.block_until_ready(out)

    # Pure-JAX f32 reference (identical math to the PyTorch module). The
    # kernel feeds the MXU bf16 operands with f32 accumulation, so use a
    # ~1e-2-level tolerance.
    w1x, w1y, b1, w2, b2, w3, b3 = params
    inp = jnp.concatenate([x, y], axis=1)
    w1 = jnp.concatenate([w1x, w1y], axis=0)
    ref = jnp.maximum(inp @ w1 + b1, 0.0)
    ref = jnp.maximum(ref @ w2 + b2, 0.0)
    ref = ref @ w3 + b3

    assert out.shape == (batch, r_dim)
    assert jnp.allclose(out, ref, atol=2e-2, rtol=2e-2), (
        float(jnp.max(jnp.abs(out - ref))))
    print("KERNEL_OK")
</pallas_src>

<mosaic_0001>
module attributes {stable_mosaic.version = 11 : i64} {
  func.func @kernel(%arg0: i32, %arg1: memref<8x2xf32, #tpu.memory_space<vmem>>, %arg2: memref<8x1xf32, #tpu.memory_space<vmem>>, %arg3: memref<2x32xf32, #tpu.memory_space<vmem>>, %arg4: memref<1x32xf32, #tpu.memory_space<vmem>>, %arg5: memref<1x32xf32, #tpu.memory_space<vmem>>, %arg6: memref<32x32xbf16, #tpu.memory_space<vmem>>, %arg7: memref<1x32xf32, #tpu.memory_space<vmem>>, %arg8: memref<32x16xbf16, #tpu.memory_space<vmem>>, %arg9: memref<1x16xf32, #tpu.memory_space<vmem>>, %arg10: memref<8x16xf32, #tpu.memory_space<vmem>>) attributes {dimension_semantics = [#tpu.dimension_semantics<parallel>], iteration_bounds = array<i64: 2>, scalar_prefetch = 0 : i64, scratch_operands = 0 : i64, tpu.core_type = #tpu.core_type<tc>, window_params = [{transform_indices = @transform_0, window_bounds = array<i64: 8, 2>}, {transform_indices = @transform_1, window_bounds = array<i64: 8, 1>}, {pipeline_mode = #tpu.pipeline_mode<synchronous>, transform_indices = @transform_2, window_bounds = array<i64: 2, 32>}, {pipeline_mode = #tpu.pipeline_mode<synchronous>, transform_indices = @transform_3, window_bounds = array<i64: 1, 32>}, {pipeline_mode = #tpu.pipeline_mode<synchronous>, transform_indices = @transform_4, window_bounds = array<i64: 1, 32>}, {pipeline_mode = #tpu.pipeline_mode<synchronous>, transform_indices = @transform_5, window_bounds = array<i64: 32, 32>}, {pipeline_mode = #tpu.pipeline_mode<synchronous>, transform_indices = @transform_6, window_bounds = array<i64: 1, 32>}, {pipeline_mode = #tpu.pipeline_mode<synchronous>, transform_indices = @transform_7, window_bounds = array<i64: 32, 16>}, {pipeline_mode = #tpu.pipeline_mode<synchronous>, transform_indices = @transform_8, window_bounds = array<i64: 1, 16>}, {transform_indices = @transform_9, window_bounds = array<i64: 8, 16>}]} {
    %c0 = arith.constant 0 : index
    %c0_0 = arith.constant 0 : index
    %0 = vector.load %arg3[%c0, %c0_0] : memref<2x32xf32, #tpu.memory_space<vmem>>, vector<2x32xf32>
    %c0_1 = arith.constant 0 : index
    %c0_2 = arith.constant 0 : index
    %1 = vector.load %arg4[%c0_1, %c0_2] : memref<1x32xf32, #tpu.memory_space<vmem>>, vector<1x32xf32>
    %c0_3 = arith.constant 0 : index
    %c0_4 = arith.constant 0 : index
    %2 = vector.load %arg5[%c0_3, %c0_4] : memref<1x32xf32, #tpu.memory_space<vmem>>, vector<1x32xf32>
    %c0_5 = arith.constant 0 : index
    %c0_6 = arith.constant 0 : index
    %3 = vector.load %arg6[%c0_5, %c0_6] : memref<32x32xbf16, #tpu.memory_space<vmem>>, vector<32x32xbf16>
    %c0_7 = arith.constant 0 : index
    %c0_8 = arith.constant 0 : index
    %4 = vector.load %arg7[%c0_7, %c0_8] : memref<1x32xf32, #tpu.memory_space<vmem>>, vector<1x32xf32>
    %c0_9 = arith.constant 0 : index
    %c0_10 = arith.constant 0 : index
    %5 = vector.load %arg8[%c0_9, %c0_10] : memref<32x16xbf16, #tpu.memory_space<vmem>>, vector<32x16xbf16>
    %c0_11 = arith.constant 0 : index
    %c0_12 = arith.constant 0 : index
    %6 = vector.load %arg9[%c0_11, %c0_12] : memref<1x16xf32, #tpu.memory_space<vmem>>, vector<1x16xf32>
    %c0_13 = arith.constant 0 : index
    %c0_14 = arith.constant 0 : index
    %7 = vector.load %arg1[%c0_13, %c0_14] : memref<8x2xf32, #tpu.memory_space<vmem>>, vector<8x2xf32>
    %c0_15 = arith.constant 0 : index
    %c0_16 = arith.constant 0 : index
    %8 = vector.load %arg2[%c0_15, %c0_16] : memref<8x1xf32, #tpu.memory_space<vmem>>, vector<8x1xf32>
    %9 = vector.extract_strided_slice %7 {offsets = [0, 0], sizes = [8, 1], strides = [1, 1]} : vector<8x2xf32> to vector<8x1xf32>
    %10 = vector.extract_strided_slice %0 {offsets = [0, 0], sizes = [1, 32], strides = [1, 1]} : vector<2x32xf32> to vector<1x32xf32>
    %11 = vector.broadcast %9 : vector<8x1xf32> to vector<8x32xf32>
    %12 = vector.broadcast %10 : vector<1x32xf32> to vector<8x32xf32>
    %13 = arith.mulf %11, %12 : vector<8x32xf32>
    %14 = vector.broadcast %2 : vector<1x32xf32> to vector<8x32xf32>
    %15 = arith.addf %14, %13 : vector<8x32xf32>
    %16 = vector.extract_strided_slice %7 {offsets = [0, 1], sizes = [8, 1], strides = [1, 1]} : vector<8x2xf32> to vector<8x1xf32>
    %17 = vector.extract_strided_slice %0 {offsets = [1, 0], sizes = [1, 32], strides = [1, 1]} : vector<2x32xf32> to vector<1x32xf32>
    %18 = vector.broadcast %16 : vector<8x1xf32> to vector<8x32xf32>
    %19 = vector.broadcast %17 : vector<1x32xf32> to vector<8x32xf32>
    %20 = arith.mulf %18, %19 : vector<8x32xf32>
    %21 = arith.addf %15, %20 : vector<8x32xf32>
    %22 = vector.broadcast %8 : vector<8x1xf32> to vector<8x32xf32>
    %23 = vector.broadcast %1 : vector<1x32xf32> to vector<8x32xf32>
    %24 = arith.mulf %22, %23 : vector<8x32xf32>
    %25 = arith.addf %21, %24 : vector<8x32xf32>
    %cst = arith.constant 0.000000e+00 : f32
    %26 = vector.broadcast %cst : f32 to vector<8x32xf32>
    %27 = arith.maximumf %25, %26 : vector<8x32xf32>
    %28 = arith.truncf %27 : vector<8x32xf32> to vector<8x32xbf16>
    %cst_17 = arith.constant dense<0.000000e+00> : vector<8x32xf32>
    %29 = tpu.matmul %28, %3, %cst_17 {dimension_numbers = #tpu.dot_dimension_numbers<[1], [0], [0], [1], [0, 0, 1, 1], [], []>} : vector<8x32xbf16>, vector<32x32xbf16>, vector<8x32xf32> -> vector<8x32xf32>
    %30 = vector.broadcast %4 : vector<1x32xf32> to vector<8x32xf32>
    %31 = arith.addf %29, %30 : vector<8x32xf32>
    %cst_18 = arith.constant 0.000000e+00 : f32
    %32 = vector.broadcast %cst_18 : f32 to vector<8x32xf32>
    %33 = arith.maximumf %31, %32 : vector<8x32xf32>
    %34 = arith.truncf %33 : vector<8x32xf32> to vector<8x32xbf16>
    %cst_19 = arith.constant dense<0.000000e+00> : vector<8x16xf32>
    %35 = tpu.matmul %34, %5, %cst_19 {dimension_numbers = #tpu.dot_dimension_numbers<[1], [0], [0], [1], [0, 0, 1, 1], [], []>} : vector<8x32xbf16>, vector<32x16xbf16>, vector<8x16xf32> -> vector<8x16xf32>
    %36 = vector.broadcast %6 : vector<1x16xf32> to vector<8x16xf32>
    %37 = arith.addf %35, %36 : vector<8x16xf32>
    %c0_20 = arith.constant 0 : index
    %c0_21 = arith.constant 0 : index
    %38 = vector.load %arg10[%c0_20, %c0_21] : memref<8x16xf32, #tpu.memory_space<vmem>>, vector<8x16xf32>
    tpu.vector_store %arg10[%c0_20, %c0_21], %37 {strides = array<i32>} : memref<8x16xf32, #tpu.memory_space<vmem>>, vector<8x16xf32>,
    return
  }
  func.func @transform_0(%arg0: i32) -> (i32, i32) {
    %c0_i32 = arith.constant 0 : i32
    %c0_i32_0 = arith.constant 0 : i32
    return %arg0, %c0_i32 : i32, i32
  }
  func.func @transform_1(%arg0: i32) -> (i32, i32) {
    %c0_i32 = arith.constant 0 : i32
    %c0_i32_0 = arith.constant 0 : i32
    return %arg0, %c0_i32 : i32, i32
  }
  func.func @transform_2(%arg0: i32) -> (i32, i32) {
    %c0_i32 = arith.constant 0 : i32
    %c0_i32_0 = arith.constant 0 : i32
    %c0_i32_1 = arith.constant 0 : i32
    return %c0_i32, %c0_i32_0 : i32, i32
  }
  func.func @transform_3(%arg0: i32) -> (i32, i32) {
    %c0_i32 = arith.constant 0 : i32
    %c0_i32_0 = arith.constant 0 : i32
    %c0_i32_1 = arith.constant 0 : i32
    return %c0_i32, %c0_i32_0 : i32, i32
  }
  func.func @transform_4(%arg0: i32) -> (i32, i32) {
    %c0_i32 = arith.constant 0 : i32
    %c0_i32_0 = arith.constant 0 : i32
    %c0_i32_1 = arith.constant 0 : i32
    return %c0_i32, %c0_i32_0 : i32, i32
  }
  func.func @transform_5(%arg0: i32) -> (i32, i32) {
    %c0_i32 = arith.constant 0 : i32
    %c0_i32_0 = arith.constant 0 : i32
    %c0_i32_1 = arith.constant 0 : i32
    return %c0_i32, %c0_i32_0 : i32, i32
  }
  func.func @transform_6(%arg0: i32) -> (i32, i32) {
    %c0_i32 = arith.constant 0 : i32
    %c0_i32_0 = arith.constant 0 : i32
    %c0_i32_1 = arith.constant 0 : i32
    return %c0_i32, %c0_i32_0 : i32, i32
  }
  func.func @transform_7(%arg0: i32) -> (i32, i32) {
    %c0_i32 = arith.constant 0 : i32
    %c0_i32_0 = arith.constant 0 : i32
    %c0_i32_1 = arith.constant 0 : i32
    return %c0_i32, %c0_i32_0 : i32, i32
  }
  func.func @transform_8(%arg0: i32) -> (i32, i32) {
    %c0_i32 = arith.constant 0 : i32
    %c0_i32_0 = arith.constant 0 : i32
    %c0_i32_1 = arith.constant 0 : i32
    return %c0_i32, %c0_i32_0 : i32, i32
  }
  func.func @transform_9(%arg0: i32) -> (i32, i32) {
    %c0_i32 = arith.constant 0 : i32
    %c0_i32_0 = arith.constant 0 : i32
    return %arg0, %c0_i32 : i32, i32
  }
}

</mosaic_0001>

<llo_original>
// kernel: tpu_custom_call.1
$region0: #{tpu_custom_call.1}
  #allocation0 [shape = 'u32[]', space=smem, size = 0x4, offset = 0x4, fixed_abs, tag = 'smem constant byte address 0x4 - core index']
  #allocation1 [shape = 'u32[144,128]{1,0:T(1,128)}', space=vmem, size = 0x12000, scoped, tag = 'internal scratch']
  %s0 = inlined_call_operand.vmem [shape: f32[16,2], index: 0, kind: input, shape index: {}]
  %s1 = inlined_call_operand.vmem [shape: f32[16,1], index: 1, kind: input, shape index: {}]
  %s2 = inlined_call_operand.vmem [shape: f32[2,32], index: 2, kind: input, shape index: {}]
  %s3 = inlined_call_operand.vmem [shape: f32[1,32], index: 3, kind: input, shape index: {}]
  %s4 = inlined_call_operand.vmem [shape: f32[1,32], index: 4, kind: input, shape index: {}]
  %s5 = inlined_call_operand.vmem [shape: bf16[32,32], index: 5, kind: input, shape index: {}]
  %s6 = inlined_call_operand.vmem [shape: f32[1,32], index: 6, kind: input, shape index: {}]
  %s7 = inlined_call_operand.vmem [shape: bf16[32,16], index: 7, kind: input, shape index: {}]
  %s8 = inlined_call_operand.vmem [shape: f32[1,16], index: 8, kind: input, shape index: {}]
  %s9 = inlined_call_operand.hbm [shape: f32[16,16], index: 9, kind: output, shape index: {}]
  %s10 = sld [smem:[#allocation0]]
  $region69: #{tpu_custom_call.1} parent=0
    _
  %s12 = ssub.s32 1, %s10
  %s13 = scalar_select 0, %s12, %s10
  $region1: #{tpu_custom_call.1} parent=0
    #allocation2 [shape = 'u8[8192]{0}', space=vmem, size = 0x2000, scoped, tag = 'output window, operand 0']
    #allocation3 [shape = 's32[2]{0}', space=sflag, size = 0x8, scoped, tag = 'scoped memory for tpu_custom_call.1']
    %14 = vsyncpa [#allocation3], 0
    %s15 = scalar_lea.sflag [#allocation3], 1
    %16 = vsyncpa %s15, 0
    loop: start=0, step=1, limit=4
    $region2: #{tpu_custom_call.1} parent=1 // loop_pre_header
      _
    $region3: #{tpu_custom_call.1} parent=1 // loop_header
      %s18 = sphi 0, %s22
      %p19 = scmp.ge.s32.totalorder %s18, 4
      %s28 = sphi 0, %s30
      %s31 = sphi 0, %s28
      %s32 = sphi 0, %s31
      %s48 = sphi 0, %s32
      %s54 = sphi 0, %s56
      %s57 = sphi 0, %s54
      %s58 = sphi 0, %s57
      %s74 = sphi 0, %s58
      %s78 = sphi 0, %s78
      %s80 = sphi 0, %s78
      %s81 = sphi 0, %s80
      %s95 = sphi 0, %s81
      %s99 = sphi 0, %s99
      %s101 = sphi 0, %s99
      %s102 = sphi 0, %s101
      %s116 = sphi 0, %s102
      %s120 = sphi 0, %s120
      %s122 = sphi 0, %s120
      %s123 = sphi 0, %s122
      %s137 = sphi 0, %s123
      %s141 = sphi 0, %s141
      %s143 = sphi 0, %s141
      %s144 = sphi 0, %s143
      %s158 = sphi 0, %s144
      %s162 = sphi 0, %s162
      %s164 = sphi 0, %s162
      %s165 = sphi 0, %s164
      %s179 = sphi 0, %s165
      %s183 = sphi 0, %s183
      %s185 = sphi 0, %s183
      %s186 = sphi 0, %s185
      %s200 = sphi 0, %s186
      %s204 = sphi 0, %s204
      %s206 = sphi 0, %s204
      %s207 = sphi 0, %s206
      %s221 = sphi 0, %s207
      %s227 = sphi 0, %s229
      %s230 = sphi 0, %s227
      %s231 = sphi 0, %s230
      %s247 = sphi 0, %s231
    $region4: #{tpu_custom_call.1} parent=1 // loop_header_branch
      %21 = sbr.rel (%p19) target = $region8
    $region5: #{tpu_custom_call.1} parent=1 // loop_body
      %s23 = ssub.s32 %s18, 1
      %s24 = ssub.s32 %s18, 2
      %s25 = sadd.s32 %s18, 1
      %s26 = ssub.s32 %s18, %s25
      %p27 = scmp.eq.s32.totalorder %s26, 0
      %s29 = sadd.s32 %s28, 1
      %s30 = scalar_select %p27, %s28, %s29
      %p33 = pneg %p27
      %p34 = scmp.eq.s32.totalorder %s18, 1
      %p35 = por %p33, %p34
      %p36 = scmp.ne.s32.totalorder %s28, %s31
      %p37 = scmp.eq.s32.totalorder %s18, 0
      %p38 = por %p36, %p37
      %p39 = scmp.ne.s32.totalorder %s28, %s31
      %p40 = scmp.eq.s32.totalorder %s23, 1
      %p41 = por %p39, %p40
      %p42 = scmp.ne.s32.totalorder %s31, %s32
      %p43 = scmp.eq.s32.totalorder %s23, 0
      %p44 = por %p42, %p43
      %p45 = scmp.ne.s32.totalorder %s31, %s32
      %p46 = scmp.eq.s32.totalorder %s24, 1
      %p47 = por %p45, %p46
      %p49 = scmp.ne.s32.totalorder %s32, %s48
      %p50 = scmp.eq.s32.totalorder %s24, 0
      %p51 = por %p49, %p50
      %s52 = ssub.s32 %s18, %s25
      %p53 = scmp.eq.s32.totalorder %s52, 0
      %s55 = sadd.s32 %s54, 1
      %s56 = scalar_select %p53, %s54, %s55
      %p59 = pneg %p53
      %p60 = scmp.eq.s32.totalorder %s18, 1
      %p61 = por %p59, %p60
      %p62 = scmp.ne.s32.totalorder %s54, %s57
      %p63 = scmp.eq.s32.totalorder %s18, 0
      %p64 = por %p62, %p63
      %p65 = scmp.ne.s32.totalorder %s54, %s57
      %p66 = scmp.eq.s32.totalorder %s23, 1
      %p67 = por %p65, %p66
      %p68 = scmp.ne.s32.totalorder %s57, %s58
      %p69 = scmp.eq.s32.totalorder %s23, 0
      %p70 = por %p68, %p69
      %p71 = scmp.ne.s32.totalorder %s57, %s58
      %p72 = scmp.eq.s32.totalorder %s24, 1
      %p73 = por %p71, %p72
      %p75 = scmp.ne.s32.totalorder %s58, %s74
      %p76 = scmp.eq.s32.totalorder %s24, 0
      %p77 = por %p75, %p76
      %s79 = sadd.s32 %s78, 1
      %p82 = scmp.eq.s32.totalorder %s18, 1
      %p83 = scmp.ne.s32.totalorder %s78, %s80
      %p84 = scmp.eq.s32.totalorder %s18, 0
      %p85 = por %p83, %p84
      %p86 = scmp.ne.s32.totalorder %s78, %s80
      %p87 = scmp.eq.s32.totalorder %s23, 1
      %p88 = por %p86, %p87
      %p89 = scmp.ne.s32.totalorder %s80, %s81
      %p90 = scmp.eq.s32.totalorder %s23, 0
      %p91 = por %p89, %p90
      %p92 = scmp.ne.s32.totalorder %s80, %s81
      %p93 = scmp.eq.s32.totalorder %s24, 1
      %p94 = por %p92, %p93
      %p96 = scmp.ne.s32.totalorder %s81, %s95
      %p97 = scmp.eq.s32.totalorder %s24, 0
      %p98 = por %p96, %p97
      %s100 = sadd.s32 %s99, 1
      %p103 = scmp.eq.s32.totalorder %s18, 1
      %p104 = scmp.ne.s32.totalorder %s99, %s101
      %p105 = scmp.eq.s32.totalorder %s18, 0
      %p106 = por %p104, %p105
      %p107 = scmp.ne.s32.totalorder %s99, %s101
      %p108 = scmp.eq.s32.totalorder %s23, 1
      %p109 = por %p107, %p108
      %p110 = scmp.ne.s32.totalorder %s101, %s102
      %p111 = scmp.eq.s32.totalorder %s23, 0
      %p112 = por %p110, %p111
      %p113 = scmp.ne.s32.totalorder %s101, %s102
      %p114 = scmp.eq.s32.totalorder %s24, 1
      %p115 = por %p113, %p114
      %p117 = scmp.ne.s32.totalorder %s102, %s116
      %p118 = scmp.eq.s32.totalorder %s24, 0
      %p119 = por %p117, %p118
      %s121 = sadd.s32 %s120, 1
      %p124 = scmp.eq.s32.totalorder %s18, 1
      %p125 = scmp.ne.s32.totalorder %s120, %s122
      %p126 = scmp.eq.s32.totalorder %s18, 0
      %p127 = por %p125, %p126
      %p128 = scmp.ne.s32.totalorder %s120, %s122
      %p129 = scmp.eq.s32.totalorder %s23, 1
      %p130 = por %p128, %p129
      %p131 = scmp.ne.s32.totalorder %s122, %s123
      %p132 = scmp.eq.s32.totalorder %s23, 0
      %p133 = por %p131, %p132
      %p134 = scmp.ne.s32.totalorder %s122, %s123
      %p135 = scmp.eq.s32.totalorder %s24, 1
      %p136 = por %p134, %p135
      %p138 = scmp.ne.s32.totalorder %s123, %s137
      %p139 = scmp.eq.s32.totalorder %s24, 0
      %p140 = por %p138, %p139
      %s142 = sadd.s32 %s141, 1
      %p145 = scmp.eq.s32.totalorder %s18, 1
      %p146 = scmp.ne.s32.totalorder %s141, %s143
      %p147 = scmp.eq.s32.totalorder %s18, 0
      %p148 = por %p146, %p147
      %p149 = scmp.ne.s32.totalorder %s141, %s143
      %p150 = scmp.eq.s32.totalorder %s23, 1
      %p151 = por %p149, %p150
      %p152 = scmp.ne.s32.totalorder %s143, %s144
      %p153 = scmp.eq.s32.totalorder %s23, 0
      %p154 = por %p152, %p153
      %p155 = scmp.ne.s32.totalorder %s143, %s144
      %p156 = scmp.eq.s32.totalorder %s24, 1
      %p157 = por %p155, %p156
      %p159 = scmp.ne.s32.totalorder %s144, %s158
      %p160 = scmp.eq.s32.totalorder %s24, 0
      %p161 = por %p159, %p160
      %s163 = sadd.s32 %s162, 1
      %p166 = scmp.eq.s32.totalorder %s18, 1
      %p167 = scmp.ne.s32.totalorder %s162, %s164
      %p168 = scmp.eq.s32.totalorder %s18, 0
      %p169 = por %p167, %p168
      %p170 = scmp.ne.s32.totalorder %s162, %s164
      %p171 = scmp.eq.s32.totalorder %s23, 1
      %p172 = por %p170, %p171
      %p173 = scmp.ne.s32.totalorder %s164, %s165
      %p174 = scmp.eq.s32.totalorder %s23, 0
      %p175 = por %p173, %p174
      %p176 = scmp.ne.s32.totalorder %s164, %s165
      %p177 = scmp.eq.s32.totalorder %s24, 1
      %p178 = por %p176, %p177
      %p180 = scmp.ne.s32.totalorder %s165, %s179
      %p181 = scmp.eq.s32.totalorder %s24, 0
      %p182 = por %p180, %p181
      %s184 = sadd.s32 %s183, 1
      %p187 = scmp.eq.s32.totalorder %s18, 1
      %p188 = scmp.ne.s32.totalorder %s183, %s185
      %p189 = scmp.eq.s32.totalorder %s18, 0
      %p190 = por %p188, %p189
      %p191 = scmp.ne.s32.totalorder %s183, %s185
      %p192 = scmp.eq.s32.totalorder %s23, 1
      %p193 = por %p191, %p192
      %p194 = scmp.ne.s32.totalorder %s185, %s186
      %p195 = scmp.eq.s32.totalorder %s23, 0
      %p196 = por %p194, %p195
      %p197 = scmp.ne.s32.totalorder %s185, %s186
      %p198 = scmp.eq.s32.totalorder %s24, 1
      %p199 = por %p197, %p198
      %p201 = scmp.ne.s32.totalorder %s186, %s200
      %p202 = scmp.eq.s32.totalorder %s24, 0
      %p203 = por %p201, %p202
      %s205 = sadd.s32 %s204, 1
      %p208 = scmp.eq.s32.totalorder %s18, 1
      %p209 = scmp.ne.s32.totalorder %s204, %s206
      %p210 = scmp.eq.s32.totalorder %s18, 0
      %p211 = por %p209, %p210
      %p212 = scmp.ne.s32.totalorder %s204, %s206
      %p213 = scmp.eq.s32.totalorder %s23, 1
      %p214 = por %p212, %p213
      %p215 = scmp.ne.s32.totalorder %s206, %s207
      %p216 = scmp.eq.s32.totalorder %s23, 0
      %p217 = por %p215, %p216
      %p218 = scmp.ne.s32.totalorder %s206, %s207
      %p219 = scmp.eq.s32.totalorder %s24, 1
      %p220 = por %p218, %p219
      %p222 = scmp.ne.s32.totalorder %s207, %s221
      %p223 = scmp.eq.s32.totalorder %s24, 0
      %p224 = por %p222, %p223
      %s225 = ssub.s32 %s18, %s25
      %p226 = scmp.eq.s32.totalorder %s225, 0
      %s228 = sadd.s32 %s227, 1
      %s229 = scalar_select %p226, %s227, %s228
      %p232 = pneg %p226
      %p233 = scmp.eq.s32.totalorder %s18, 1
      %p234 = por %p232, %p233
      %p235 = scmp.ne.s32.totalorder %s227, %s230
      %p236 = scmp.eq.s32.totalorder %s18, 0
      %p237 = por %p235, %p236
      %p238 = scmp.ne.s32.totalorder %s227, %s230
      %p239 = scmp.eq.s32.totalorder %s23, 1
      %p240 = por %p238, %p239
      %p241 = scmp.ne.s32.totalorder %s230, %s231
      %p242 = scmp.eq.s32.totalorder %s23, 0
      %p243 = por %p241, %p242
      %p244 = scmp.ne.s32.totalorder %s230, %s231
      %p245 = scmp.eq.s32.totalorder %s24, 1
      %p246 = por %p244, %p245
      %p248 = scmp.ne.s32.totalorder %s231, %s247
      %p249 = scmp.eq.s32.totalorder %s24, 0
      %p250 = por %p248, %p249
      %p251 = scmp.le.s32.totalorder 1, %s18
      %p252 = scmp.lt.s32.totalorder %s18, 3
      %p253 = pnand %p251, %p252
      %p254 = pneg %p253
      // Predicated region
      $region9: #{tpu_custom_call.1} parent=5 // pred_check
        _
      $region10: #{tpu_custom_call.1} parent=5 // pred_check_branch
        %256 = sbr.rel (%p253) target = $region12
      $region11: #{tpu_custom_call.1} parent=5 // pred_region
        %s257 = ssub.s32 %s18, 1
        // Predicated region
        $region13: #{tpu_custom_call.1} parent=11 // pred_check
          %p258 = pneg %p91
        $region14: #{tpu_custom_call.1} parent=11 // pred_check_branch
          %260 = sbr.rel (%p258) target = $region16
        $region15: #{tpu_custom_call.1} parent=11 // pred_region
          _
        $region16: #{tpu_custom_call.1} parent=11 // pred_fallthru
          _
        // Predicated region
        $region17: #{tpu_custom_call.1} parent=11 // pred_check
          %p261 = pneg %p112
        $region18: #{tpu_custom_call.1} parent=11 // pred_check_branch
          %263 = sbr.rel (%p261) target = $region20
        $region19: #{tpu_custom_call.1} parent=11 // pred_region
          _
        $region20: #{tpu_custom_call.1} parent=11 // pred_fallthru
          _
        // Predicated region
        $region21: #{tpu_custom_call.1} parent=11 // pred_check
          %p264 = pneg %p133
        $region22: #{tpu_custom_call.1} parent=11 // pred_check_branch
          %266 = sbr.rel (%p264) target = $region24
        $region23: #{tpu_custom_call.1} parent=11 // pred_region
          _
        $region24: #{tpu_custom_call.1} parent=11 // pred_fallthru
          _
        // Predicated region
        $region25: #{tpu_custom_call.1} parent=11 // pred_check
          %p267 = pneg %p154
        $region26: #{tpu_custom_call.1} parent=11 // pred_check_branch
          %269 = sbr.rel (%p267) target = $region28
        $region27: #{tpu_custom_call.1} parent=11 // pred_region
          _
        $region28: #{tpu_custom_call.1} parent=11 // pred_fallthru
          _
        // Predicated region
        $region29: #{tpu_custom_call.1} parent=11 // pred_check
          %p270 = pneg %p175
        $region30: #{tpu_custom_call.1} parent=11 // pred_check_branch
          %272 = sbr.rel (%p270) target = $region32
        $region31: #{tpu_custom_call.1} parent=11 // pred_region
          _
        $region32: #{tpu_custom_call.1} parent=11 // pred_fallthru
          _
        // Predicated region
        $region33: #{tpu_custom_call.1} parent=11 // pred_check
          %p273 = pneg %p196
        $region34: #{tpu_custom_call.1} parent=11 // pred_check_branch
          %275 = sbr.rel (%p273) target = $region36
        $region35: #{tpu_custom_call.1} parent=11 // pred_region
          _
        $region36: #{tpu_custom_call.1} parent=11 // pred_fallthru
          _
        // Predicated region
        $region37: #{tpu_custom_call.1} parent=11 // pred_check
          %p276 = pneg %p217
        $region38: #{tpu_custom_call.1} parent=11 // pred_check_branch
          %278 = sbr.rel (%p276) target = $region40
        $region39: #{tpu_custom_call.1} parent=11 // pred_region
          _
        $region40: #{tpu_custom_call.1} parent=11 // pred_fallthru
          _
      $region12: #{tpu_custom_call.1} parent=5 // pred_fallthru
        _
      %p279 = scmp.lt.s32.totalorder %s18, 2
      // Predicated region
      $region41: #{tpu_custom_call.1} parent=5 // pred_check
        %p280 = pneg %p279
      $region42: #{tpu_custom_call.1} parent=5 // pred_check_branch
        %282 = sbr.rel (%p280) target = $region44
      $region43: #{tpu_custom_call.1} parent=5 // pred_region
        // Predicated region
        $region45: #{tpu_custom_call.1} parent=43 // pred_check
          %p283 = pneg %p38
        $region46: #{tpu_custom_call.1} parent=43 // pred_check_branch
          %285 = sbr.rel (%p283) target = $region48
        $region47: #{tpu_custom_call.1} parent=43 // pred_region
          %p286 = scmp.lt.s32.totalorder %s18, 1
          %s287 = scalar_select %p286, %s18, 1
          %s288 = smul.addr %s287, 8
          %s289 = scalar_lea.vmem %s0, %s288
        $region48: #{tpu_custom_call.1} parent=43 // pred_fallthru
          _
        // Predicated region
        $region49: #{tpu_custom_call.1} parent=43 // pred_check
          %p290 = pneg %p64
        $region50: #{tpu_custom_call.1} parent=43 // pred_check_branch
          %292 = sbr.rel (%p290) target = $region52
        $region51: #{tpu_custom_call.1} parent=43 // pred_region
          %p293 = scmp.lt.s32.totalorder %s18, 1
          %s294 = scalar_select %p293, %s18, 1
          %s295 = smul.addr %s294, 8
          %s296 = scalar_lea.vmem %s1, %s295
        $region52: #{tpu_custom_call.1} parent=43 // pred_fallthru
          _
      $region44: #{tpu_custom_call.1} parent=5 // pred_fallthru
        _
      %p297 = scmp.le.s32.totalorder 1, %s18
      %p298 = scmp.lt.s32.totalorder %s18, 3
      %p299 = pnand %p297, %p298
      %p300 = pneg %p299
      // Predicated region
      $region53: #{tpu_custom_call.1} parent=5 // pred_check
        _
      $region54: #{tpu_custom_call.1} parent=5 // pred_check_branch
        %302 = sbr.rel (%p299) target = $region56
      $region55: #{tpu_custom_call.1} parent=5 // pred_region
        %s303 = ssub.s32 %s18, 1
        %p304 = scmp.lt.s32.totalorder %s23, 1
        %s305 = scalar_select %p304, %s23, 1
        %s306 = smul.addr %s305, 8
        %s307 = scalar_lea.vmem %s0, %s306
        %p308 = pneg %p44
        %p309 = pneg %p41
        %p310 = scmp.lt.s32.totalorder %s23, 1
        %s311 = scalar_select %p310, %s23, 1
        %s312 = smul.addr %s311, 8
        %s313 = scalar_lea.vmem %s1, %s312
        %p314 = pneg %p70
        %p315 = pneg %p67
        %p316 = pneg %p91
        %p317 = pneg %p88
        %p318 = pneg %p112
        %p319 = pneg %p109
        %p320 = pneg %p133
        %p321 = pneg %p130
        %p322 = pneg %p154
        %p323 = pneg %p151
        %p324 = pneg %p175
        %p325 = pneg %p172
        %p326 = pneg %p196
        %p327 = pneg %p193
        %p328 = pneg %p217
        %p329 = pneg %p214
        %p330 = pneg %p243
        %p331 = pneg %p240
        %s332 = sand.u32 %s230, 1
        %s333 = scalar_lea.sflag [#allocation3], %s332
        %s334 = sand.u32 %s230, 1
        %s335 = smul.addr %s334, 8
        %s336 = scalar_lea.vmem [#allocation2], %s335
        %p337 = scmp.lt.s32.totalorder %s23, 1
        %s338 = scalar_select %p337, %s23, 1
        %s339 = smul.addr %s338, 8
        %s340 = scalar_lea.vmem %s0, %s339
        %p341 = scmp.lt.s32.totalorder %s23, 1
        %s342 = scalar_select %p341, %s23, 1
        %s343 = smul.addr %s342, 8
        %s344 = scalar_lea.vmem %s1, %s343
        %v346 = vld [vmem:[%s2] sm:$0x3]
        %v347 = vld [vmem:[%s3] sm:$0x1]
        %v348 = vld [vmem:[%s4] sm:$0x1]
        %v349 = vld [vmem:[%s5] sm:$0xf]
        %v350 = vld [vmem:[%s5 + $0x4] sm:$0xf]
        %v351 = vld [vmem:[%s5 + $0x8] sm:$0xf]
        %v352 = vld [vmem:[%s5 + $0xc] sm:$0xf]
        %v353 = vld [vmem:[%s6] sm:$0x1]
        %v354 = vld [vmem:[%s7] sm:$0xf]
        %v355 = vld [vmem:[%s7 + $0x4] sm:$0xf]
        %v356 = vld [vmem:[%s7 + $0x8] sm:$0xf]
        %v357 = vld [vmem:[%s7 + $0xc] sm:$0xf]
        %v358 = vld [vmem:[%s8] sm:$0x1]
        %v359 = vld [vmem:[%s340] sm:$0xff]
        %v360 = vld [vmem:[%s344] sm:$0xff]
        %362 = vset.pattern.permute.xlu0 0
        %363 = vperm.xlu0 %362, %v359
        %v364 = vpop.permute.xlu0 %363
        %v366 = vlaneseq
        %v367 = vshrl.u32 %v366, 7
        %v368 = vsub.s32 0, %v367
        %v369 = vrot.slane %v346, %v368
        %v370 = vmul.f32 %v364, %v369
        %v372 = vlaneseq
        %v373 = vshrl.u32 %v372, 7
        %v374 = vsub.s32 0, %v373
        %v375 = vrot.slane %v348, %v374
        %v377 = vadd.f32 %v375, %v370
        %378 = vset.pattern.permute.xlu0 1
        %379 = vperm.xlu0 %378, %v359
        %v380 = vpop.permute.xlu0 %379
        %v382 = vlaneseq
        %v383 = vshrl.u32 %v382, 7
        %v384 = vsub.s32 1, %v383
        %v385 = vrot.slane %v346, %v384
        %v386 = vmul.f32 %v380, %v385
        %v387 = vadd.f32 %v377, %v386
        %389 = vset.pattern.permute.xlu0 0
        %390 = vperm.xlu0 %389, %v360
        %v391 = vpop.permute.xlu0 %390
        %v394 = vlaneseq
        %v395 = vshrl.u32 %v394, 7
        %v396 = vsub.s32 0, %v395
        %v397 = vrot.slane %v347, %v396
        %v399 = vmul.f32 %v391, %v397
        %v400 = vadd.f32 %v387, %v399
        %v401 = vmax.f32 %v400, 0.0
        %v402 = vpack.c.bf16 %v401, %v401
        %v404 = vlaneseq
        %v405 = vshrl.u32 %v404, 7
        %v406 = vsub.s32 0, %v405
        %v407 = vrot.slane %v353, %v406
        %v413 = vunpack.c.l.b16 %v349
        %v414 = vunpack.c.l.b16 %v350
        %v415 = vunpack.c.l.b16 %v351
        %v416 = vunpack.c.l.b16 %v352
        %v417 = vpack.c.b16 %v414, %v413
        %v418 = vpack.c.b16 %v416, %v415
        %vm421 = vcmask 261120
        %v423 = vsel %vm421, %v402, 0
        %425 = vmatprep.subr.bf16.mxu0 0
        %426 = vmatpush1.bf16.msra.mxu0 0
        %427 = vmatprep.subr.bf16.mxu0 0
        %428 = vmatpush1.bf16.msra.mxu0 0
        %429 = vmatprep.subr.bf16.mxu0 0
        %430 = vmatpush1.bf16.msra.mxu0 0
        %431 = vmatprep.subr.bf16.mxu0 0
        %432 = vmatpush1.bf16.msra.mxu0 0
        %433 = vmatprep.subr.bf16.mxu0 0
        %434 = vmatpush1.bf16.msra.mxu0 0
        %435 = vmatprep.subr.bf16.mxu0 0
        %436 = vmatpush1.bf16.msra.mxu0 0
        %437 = vmatprep.subr.bf16.mxu0 0
        %438 = vmatpush1.bf16.msra.mxu0 %v418
        %439 = vmatprep.subr.bf16.mxu0 0
        %440 = vmatpush1.bf16.msra.mxu0 %v417
        %441 = vmatprep.subr.bf16.mxu0 0
        %442 = vmatpush2.bf16.msra.mxu0 0
        %443 = vmatprep.subr.bf16.mxu0 0
        %444 = vmatpush2.bf16.msra.mxu0 0
        %445 = vmatprep.subr.bf16.mxu0 0
        %446 = vmatpush2.bf16.msra.mxu0 0
        %447 = vmatprep.subr.bf16.mxu0 0
        %448 = vmatpush2.bf16.msra.mxu0 0
        %449 = vmatprep.subr.bf16.mxu0 0
        %450 = vmatpush2.bf16.msra.mxu0 0
        %451 = vmatprep.subr.bf16.mxu0 0
        %452 = vmatpush2.bf16.msra.mxu0 0
        %453 = vmatprep.subr.bf16.mxu0 0
        %454 = vmatpush2.bf16.msra.mxu0 0
        %455 = vmatprep.subr.bf16.mxu0 0
        %456 = vmatpush2.bf16.msra.mxu0 0
        %457 = vmatprep.mubr.bf16.mxu0 0
        %458 = vmatmul.mubr.bf16.gmra.mxu0 %v423
        %v459 = vpop.f32.mrf.mxu0
        %v460 = vadd.f32 %v407, %v459
        %v461 = vpop.f32.mrf.mxu0
        %v462 = vpop.f32.mrf.mxu0
        %v463 = vpop.f32.mrf.mxu0
        %464 = vdwg.mxu0
        %v465 = vmax.f32 %v460, 0.0
        %v466 = vpack.c.bf16 %v465, %v465
        %v468 = vlaneseq
        %v469 = vshrl.u32 %v468, 7
        %v470 = vsub.s32 0, %v469
        %v471 = vrot.slane %v358, %v470
        %v477 = vunpack.c.l.b16 %v354
        %v478 = vunpack.c.l.b16 %v355
        %v479 = vunpack.c.l.b16 %v356
        %v480 = vunpack.c.l.b16 %v357
        %v481 = vpack.c.b16 %v478, %v477
        %v482 = vpack.c.b16 %v480, %v479
        %v486 = vsel %vm421, %v466, 0
        %488 = vmatprep.subr.bf16.mxu0 0
        %489 = vmatpush1.bf16.msra.mxu0 0
        %490 = vmatprep.subr.bf16.mxu0 0
        %491 = vmatpush1.bf16.msra.mxu0 0
        %492 = vmatprep.subr.bf16.mxu0 0
        %493 = vmatpush1.bf16.msra.mxu0 0
        %494 = vmatprep.subr.bf16.mxu0 0
        %495 = vmatpush1.bf16.msra.mxu0 0
        %496 = vmatprep.subr.bf16.mxu0 0
        %497 = vmatpush1.bf16.msra.mxu0 0
        %498 = vmatprep.subr.bf16.mxu0 0
        %499 = vmatpush1.bf16.msra.mxu0 0
        %500 = vmatprep.subr.bf16.mxu0 0
        %501 = vmatpush1.bf16.msra.mxu0 %v482
        %502 = vmatprep.subr.bf16.mxu0 0
        %503 = vmatpush1.bf16.msra.mxu0 %v481
        %504 = vmatprep.subr.bf16.mxu0 0
        %505 = vmatpush2.bf16.msra.mxu0 0
        %506 = vmatprep.subr.bf16.mxu0 0
        %507 = vmatpush2.bf16.msra.mxu0 0
        %508 = vmatprep.subr.bf16.mxu0 0
        %509 = vmatpush2.bf16.msra.mxu0 0
        %510 = vmatprep.subr.bf16.mxu0 0
        %511 = vmatpush2.bf16.msra.mxu0 0
        %512 = vmatprep.subr.bf16.mxu0 0
        %513 = vmatpush2.bf16.msra.mxu0 0
        %514 = vmatprep.subr.bf16.mxu0 0
        %515 = vmatpush2.bf16.msra.mxu0 0
        %516 = vmatprep.subr.bf16.mxu0 0
        %517 = vmatpush2.bf16.msra.mxu0 0
        %518 = vmatprep.subr.bf16.mxu0 0
        %519 = vmatpush2.bf16.msra.mxu0 0
        %520 = vmatprep.mubr.bf16.mxu0 0
        %521 = vmatmul.mubr.bf16.gmra.mxu0 %v486
        %v522 = vpop.f32.mrf.mxu0
        %v523 = vadd.f32 %v471, %v522
        %v524 = vpop.f32.mrf.mxu0
        %v525 = vpop.f32.mrf.mxu0
        %v526 = vpop.f32.mrf.mxu0
        %527 = vdwg.mxu0
        %vm528 = vcmask 130048
        %529 = vst.msk [vmem:[%s336] sm:$0xff] %vm528, %v523
        %s530 = sand.u32 %s230, 1
        %s531 = scalar_lea.sflag [#allocation3], %s530
        %s532 = sand.u32 %s230, 1
        %s533 = smul.addr %s532, 8
        %s534 = scalar_lea.vmem [#allocation2], %s533
        // Predicated region
        $region57: #{tpu_custom_call.1} parent=55 // pred_check
          %p535 = pneg %p240
        $region58: #{tpu_custom_call.1} parent=55 // pred_check_branch
          %537 = sbr.rel (%p535) target = $region60
        $region59: #{tpu_custom_call.1} parent=55 // pred_region
          %s539 = ssub.s32 128, 128
          %540 = vsyncadd %s531, %s539
          %s541 = smul.addr %s23, 128
          %s542 = scalar_lea.hbm %s9, %s541
          %s544 = sshll.u32 %s534, 4
          %s545 = int_to_ptr.vmem [resolvable:$true] %s544
          %547 = dma.vmem_to_hbm [thread:$0]  %s545, 128, %s542, %s531
        $region60: #{tpu_custom_call.1} parent=55 // pred_fallthru
          _
      $region56: #{tpu_custom_call.1} parent=5 // pred_fallthru
        _
      %p548 = scmp.le.s32.totalorder 2, %s18
      // Predicated region
      $region61: #{tpu_custom_call.1} parent=5 // pred_check
        %p549 = pneg %p548
      $region62: #{tpu_custom_call.1} parent=5 // pred_check_branch
        %551 = sbr.rel (%p549) target = $region64
      $region63: #{tpu_custom_call.1} parent=5 // pred_region
        %s552 = ssub.s32 %s18, 2
        // Predicated region
        $region65: #{tpu_custom_call.1} parent=63 // pred_check
          %p553 = pneg %p246
        $region66: #{tpu_custom_call.1} parent=63 // pred_check_branch
          %555 = sbr.rel (%p553) target = $region68
        $region67: #{tpu_custom_call.1} parent=63 // pred_region
          %s556 = sand.u32 %s231, 1
          %s557 = scalar_lea.sflag [#allocation3], %s556
          %s558 = sand.u32 %s231, 1
          %s559 = smul.addr %s558, 8
          %s560 = scalar_lea.vmem [#allocation2], %s559
          %561 = dma.done %s557, 128
        $region68: #{tpu_custom_call.1} parent=63 // pred_fallthru
          _
      $region64: #{tpu_custom_call.1} parent=5 // pred_fallthru
        _
    $region6: #{tpu_custom_call.1} parent=1 // loop_footer
      %s22 = sadd.s32 1, %s18
    $region7: #{tpu_custom_call.1} parent=1 // loop_footer_branch
      %17 = sbr.rel target = $region3
    $region8: #{tpu_custom_call.1} parent=1 // loop_exit
      _
    %562 = vsyncpa [#allocation3], 1
    %s563 = scalar_lea.sflag [#allocation3], 1
    %564 = vsyncpa %s563, 1

</llo_original>
